<compile_context>
chip_gen: v5e
topology: v5e:2x2
jax: 0.10.0
libtpu: 0.0.40
codegen_flags: <defaults>
</compile_context>

<pallas_src>
import jax
import jax.numpy as jnp
from jax import lax
from jax.experimental import pallas as pl
from jax.experimental.pallas import tpu as pltpu


_NEG_BIG = -1e30  # stand-in for -inf on padded class columns (exp underflows to 0)


def _make_kernel(n_rows, n_cls, tile_n, c_pad):
    """Builds the CE kernel with static shape info baked in via closure."""

    def kernel(logits_ref, label_ref, out_ref):
        i = pl.program_id(0)

        logits = logits_ref[...].astype(jnp.float32)   # [tile_n, c_pad]
        label = label_ref[...].astype(jnp.float32)     # [tile_n, c_pad]

        # Validity masks for padded class columns / padded rows.
        col_ids = lax.broadcasted_iota(jnp.int32, (tile_n, c_pad), 1)
        col_valid = col_ids < n_cls                                    # [tile_n, c_pad]
        row_ids = lax.broadcasted_iota(jnp.int32, (tile_n, 1), 0) + i * tile_n
        row_valid = row_ids < n_rows                                   # [tile_n, 1]

        # Label normalization: one reciprocal per row instead of per-element div.
        # (Rows whose labels sum to 0 still produce NaN/Inf, matching the
        #  PyTorch formula; only *padding* rows are guarded.)
        rsum = jnp.sum(label, axis=1, keepdims=True)                   # padded cols are 0
        rsum_safe = jnp.where(row_valid, rsum, 1.0)
        inv = pl.reciprocal(rsum_safe, approx=False)
        lab = jnp.where(col_valid, label * inv + 1e-10, 0.0)

        # Numerically stable log-softmax, folded:
        #   sum(lab * (shifted - lse)) = sum(lab * shifted) - lse * sum(lab)
        lmask = jnp.where(col_valid, logits, _NEG_BIG)
        m = jnp.max(lmask, axis=1, keepdims=True)
        shifted = lmask - m
        lse = jnp.log(jnp.sum(jnp.exp(shifted), axis=1, keepdims=True))  # [tile_n, 1]

        dot_ls = jnp.sum(lab * shifted, axis=1, keepdims=True)           # [tile_n, 1]
        lab_sum = jnp.sum(lab, axis=1, keepdims=True)                    # [tile_n, 1]
        per_row = dot_ls - lse * lab_sum                                 # [tile_n, 1]
        per_row = jnp.where(row_valid, per_row, 0.0)

        partial = jnp.sum(per_row)                                       # scalar
        out_ref[...] = jnp.full((1, 8, 128), partial, dtype=jnp.float32)

    return kernel


def cross_entropy_loss(logits, label, tile_n=None):
    """Pallas wrapper. logits, label: [N, C] arrays. Returns scalar f32 loss."""
    assert logits.shape == label.shape and logits.ndim == 2
    n, c = logits.shape
    itemsize = jnp.dtype(logits.dtype).itemsize

    # Class axis padded to a lane-dense multiple of 128.
    c_pad = pl.cdiv(c, 128) * 128

    # Generation-aware VMEM budget (v5e/v6e: 128 MiB, v7x: 64 MiB per TC).
    try:
        vmem_cap = pltpu.get_tpu_info().vmem_capacity_bytes
    except Exception:  # conservative fallback if the query is unavailable
        vmem_cap = 64 * 1024 * 1024
    vmem_limit = min(int(vmem_cap * 3 // 4), 96 * 1024 * 1024)

    if tile_n is None:
        # 2 inputs x 2 pipeline buffers (input dtype) + ~8 f32 whole-tile temps.
        per_row_bytes = c_pad * (4 * itemsize + 8 * 4)
        tile_n = max(8, min(int(vmem_limit // per_row_bytes), 1024))
    tile_n = max(8, (int(tile_n) // 8) * 8)
    tile_n = min(tile_n, pl.cdiv(n, 8) * 8)

    num_tiles = pl.cdiv(n, tile_n)
    n_pad = num_tiles * tile_n

    # Pad to tile boundaries; kernel masks padded rows/columns explicitly.
    if n_pad != n or c_pad != c:
        logits = jnp.pad(logits, ((0, n_pad - n), (0, c_pad - c)))
        label = jnp.pad(label, ((0, n_pad - n), (0, c_pad - c)))

    kernel = _make_kernel(n, c, tile_n, c_pad)

    partials = pl.pallas_call(
        kernel,
        out_shape=jax.ShapeDtypeStruct((num_tiles, 8, 128), jnp.float32),
        grid_spec=pltpu.PrefetchScalarGridSpec(
            num_scalar_prefetch=0,
            grid=(num_tiles,),
            in_specs=[
                pl.BlockSpec((tile_n, c_pad), lambda i: (i, 0)),
                pl.BlockSpec((tile_n, c_pad), lambda i: (i, 0)),
            ],
            out_specs=pl.BlockSpec((1, 8, 128), lambda i: (i, 0, 0)),
        ),
        compiler_params=pltpu.CompilerParams(
            dimension_semantics=("parallel",),
            vmem_limit_bytes=vmem_limit,
        ),
        cost_estimate=pl.CostEstimate(
            flops=int(6 * n_pad * c_pad),
            transcendentals=int(n_pad * c_pad),
            bytes_accessed=int(2 * n_pad * c_pad * itemsize + num_tiles * 8 * 128 * 4),
        ),
    )(logits, label)

    # Tiny final reduction in the wrapper: mean over the true N, then negate.
    return -jnp.sum(partials[:, 0, 0]) / n


def _reference(logits, label):
    lab = label / jnp.sum(label, axis=1, keepdims=True) + 1e-10
    logp = jax.nn.log_softmax(logits, axis=1)
    return -jnp.mean(jnp.sum(lab * logp, axis=1), axis=0)


if __name__ == "__main__":
    key = jax.random.PRNGKey(0)
    k1, k2, k3, k4 = jax.random.split(key, 4)

    # Primary small test (soft labels over classes, matches the module).
    N, C = 8, 32
    logits = jax.random.normal(k1, (N, C), dtype=jnp.float32)
    label = jax.random.uniform(k2, (N, C), dtype=jnp.float32, minval=0.1, maxval=1.0)
    loss = cross_entropy_loss(logits, label)
    jax.block_until_ready(loss)
    ref = _reference(logits, label)
    assert jnp.allclose(loss, ref, rtol=1e-5, atol=1e-5), (loss, ref)

    # Ragged shapes (N % tile != 0, C % 128 != 0) to exercise the masking path
    # and multi-tile "parallel" grid with per-tile partial sums.
    N2, C2 = 20, 160
    logits2 = jax.random.normal(k3, (N2, C2), dtype=jnp.float32)
    label2 = jax.random.uniform(k4, (N2, C2), dtype=jnp.float32, minval=0.1, maxval=1.0)
    loss2 = cross_entropy_loss(logits2, label2, tile_n=8)  # forces 3 row tiles
    jax.block_until_ready(loss2)
    ref2 = _reference(logits2, label2)
    assert jnp.allclose(loss2, ref2, rtol=1e-5, atol=1e-5), (loss2, ref2)

    print("KERNEL_OK")
</pallas_src>

<mosaic_0001>
module attributes {stable_mosaic.version = 11 : i64} {
  func.func @kernel(%arg0: i32, %arg1: memref<8x128xf32, #tpu.memory_space<vmem>>, %arg2: memref<8x128xf32, #tpu.memory_space<vmem>>, %arg3: memref<1x8x128xf32, #tpu.memory_space<vmem>>) attributes {dimension_semantics = [#tpu.dimension_semantics<parallel>], iteration_bounds = array<i64: 1>, scalar_prefetch = 0 : i64, scratch_operands = 0 : i64, tpu.core_type = #tpu.core_type<tc>, window_params = [{transform_indices = @transform_0, window_bounds = array<i64: 8, 128>}, {transform_indices = @transform_1, window_bounds = array<i64: 8, 128>}, {transform_indices = @transform_2, window_bounds = array<i64: 1, 8, 128>}]} {
    %c0 = arith.constant 0 : index
    %c0_0 = arith.constant 0 : index
    %0 = vector.load %arg1[%c0, %c0_0] : memref<8x128xf32, #tpu.memory_space<vmem>>, vector<8x128xf32>
    %c0_1 = arith.constant 0 : index
    %c0_2 = arith.constant 0 : index
    %1 = vector.load %arg2[%c0_1, %c0_2] : memref<8x128xf32, #tpu.memory_space<vmem>>, vector<8x128xf32>
    %2 = tpu.iota {dimensions = array<i32: 1>} : vector<8x128xi32>
    %c32_i32 = arith.constant 32 : i32
    %3 = vector.broadcast %c32_i32 : i32 to vector<8x128xi32>
    %4 = arith.cmpi slt, %2, %3 : vector<8x128xi32>
    %5 = tpu.iota {dimensions = array<i32: 0>} : vector<8x1xi32>
    %c8_i32 = arith.constant 8 : i32
    %6 = arith.muli %arg0, %c8_i32 : i32
    %7 = vector.broadcast %6 : i32 to vector<8x1xi32>
    %8 = arith.addi %5, %7 : vector<8x1xi32>
    %c8_i32_3 = arith.constant 8 : i32
    %9 = vector.broadcast %c8_i32_3 : i32 to vector<8x1xi32>
    %10 = arith.cmpi slt, %8, %9 : vector<8x1xi32>
    %cst = arith.constant dense<0.000000e+00> : vector<8xf32>
    %11 = vector.multi_reduction <add>, %1, %cst [1] : vector<8x128xf32> to vector<8xf32>
    %12 = vector.shape_cast %11 : vector<8xf32> to vector<8x1xf32>
    %cst_4 = arith.constant 1.000000e+00 : f32
    %13 = vector.broadcast %cst_4 : f32 to vector<8x1xf32>
    %14 = arith.select %10, %12, %13 : vector<8x1xi1>, vector<8x1xf32>
    %15 = tpu.reciprocal %14 : vector<8x1xf32> -> vector<8x1xf32>
    %16 = vector.broadcast %15 : vector<8x1xf32> to vector<8x128xf32>
    %17 = arith.mulf %1, %16 : vector<8x128xf32>
    %cst_5 = arith.constant 1.000000e-10 : f32
    %18 = vector.broadcast %cst_5 : f32 to vector<8x128xf32>
    %19 = arith.addf %17, %18 : vector<8x128xf32>
    %cst_6 = arith.constant 0.000000e+00 : f32
    %20 = vector.broadcast %cst_6 : f32 to vector<8x128xf32>
    %21 = arith.select %4, %19, %20 : vector<8x128xi1>, vector<8x128xf32>
    %cst_7 = arith.constant -1.000000e+30 : f32
    %22 = vector.broadcast %cst_7 : f32 to vector<8x128xf32>
    %23 = arith.select %4, %0, %22 : vector<8x128xi1>, vector<8x128xf32>
    %cst_8 = arith.constant dense<0xFF800000> : vector<8xf32>
    %24 = vector.multi_reduction <maximumf>, %23, %cst_8 [1] : vector<8x128xf32> to vector<8xf32>
    %25 = vector.shape_cast %24 : vector<8xf32> to vector<8x1xf32>
    %26 = vector.broadcast %25 : vector<8x1xf32> to vector<8x128xf32>
    %27 = arith.subf %23, %26 : vector<8x128xf32>
    %28 = math.exp %27 : vector<8x128xf32>
    %cst_9 = arith.constant dense<0.000000e+00> : vector<8xf32>
    %29 = vector.multi_reduction <add>, %28, %cst_9 [1] : vector<8x128xf32> to vector<8xf32>
    %30 = vector.shape_cast %29 : vector<8xf32> to vector<8x1xf32>
    %31 = math.log %30 : vector<8x1xf32>
    %32 = arith.mulf %21, %27 : vector<8x128xf32>
    %cst_10 = arith.constant dense<0.000000e+00> : vector<8xf32>
    %33 = vector.multi_reduction <add>, %32, %cst_10 [1] : vector<8x128xf32> to vector<8xf32>
    %34 = vector.shape_cast %33 : vector<8xf32> to vector<8x1xf32>
    %cst_11 = arith.constant dense<0.000000e+00> : vector<8xf32>
    %35 = vector.multi_reduction <add>, %21, %cst_11 [1] : vector<8x128xf32> to vector<8xf32>
    %36 = vector.shape_cast %35 : vector<8xf32> to vector<8x1xf32>
    %37 = arith.mulf %31, %36 : vector<8x1xf32>
    %38 = arith.subf %34, %37 : vector<8x1xf32>
    %cst_12 = arith.constant 0.000000e+00 : f32
    %39 = vector.broadcast %cst_12 : f32 to vector<8x1xf32>
    %40 = arith.select %10, %38, %39 : vector<8x1xi1>, vector<8x1xf32>
    %41 = vector.shape_cast %40 : vector<8x1xf32> to vector<1x8x1xf32>
    %cst_13 = arith.constant dense<0.000000e+00> : vector<1xf32>
    %42 = vector.multi_reduction <add>, %41, %cst_13 [1, 2] : vector<1x8x1xf32> to vector<1xf32>
    %43 = vector.shape_cast %42 : vector<1xf32> to vector<1x1x1xf32>
    %44 = vector.extract %43[0, 0, 0] : f32 from vector<1x1x1xf32>
    %45 = vector.broadcast %44 : f32 to vector<1x8x128xf32>
    %c0_14 = arith.constant 0 : index
    %c0_15 = arith.constant 0 : index
    %c0_16 = arith.constant 0 : index
    %46 = vector.load %arg3[%c0_14, %c0_15, %c0_16] : memref<1x8x128xf32, #tpu.memory_space<vmem>>, vector<1x8x128xf32>
    tpu.vector_store %arg3[%c0_14, %c0_15, %c0_16], %45 {strides = array<i32>} : memref<1x8x128xf32, #tpu.memory_space<vmem>>, vector<1x8x128xf32>,
    return
  }
  func.func @transform_0(%arg0: i32) -> (i32, i32) {
    %c0_i32 = arith.constant 0 : i32
    %c0_i32_0 = arith.constant 0 : i32
    return %arg0, %c0_i32 : i32, i32
  }
  func.func @transform_1(%arg0: i32) -> (i32, i32) {
    %c0_i32 = arith.constant 0 : i32
    %c0_i32_0 = arith.constant 0 : i32
    return %arg0, %c0_i32 : i32, i32
  }
  func.func @transform_2(%arg0: i32) -> (i32, i32, i32) {
    %c0_i32 = arith.constant 0 : i32
    %c0_i32_0 = arith.constant 0 : i32
    %c0_i32_1 = arith.constant 0 : i32
    return %arg0, %c0_i32, %c0_i32_0 : i32, i32, i32
  }
}

</mosaic_0001>

<llo_original>
// kernel: tpu_custom_call.1
$region0: #{tpu_custom_call.1}
  #allocation0 [shape = 'u32[]', space=smem, size = 0x4, offset = 0x4, fixed_abs, tag = 'smem constant byte address 0x4 - core index']
  #allocation1 [shape = 'u32[72,128]{1,0:T(1,128)}', space=vmem, size = 0x9000, scoped, tag = 'internal scratch']
  %s0 = inlined_call_operand.hbm [shape: f32[8,128], index: 0, kind: input, shape index: {}]
  %s1 = inlined_call_operand.hbm [shape: f32[8,128], index: 1, kind: input, shape index: {}]
  %s2 = inlined_call_operand.hbm [shape: f32[1,8,128], index: 2, kind: output, shape index: {}]
  %s3 = sld [smem:[#allocation0]]
  $region26: #{tpu_custom_call.1} parent=0
    _
  %s5 = ssub.s32 1, %s3
  %s6 = scalar_select 0, %s5, %s3
  $region1: #{tpu_custom_call.1} parent=0
    #allocation2 [shape = 'u8[4096]{0}', space=vmem, size = 0x1000, scoped, tag = 'input window, operand 0, single buffered']
    #allocation3 [shape = 's32[1]{0}', space=sflag, size = 0x4, scoped, tag = 'scoped memory for tpu_custom_call.1']
    #allocation4 [shape = 's32[1]{0}', space=sflag, size = 0x4, scoped, tag = 'scoped memory for tpu_custom_call.1']
    #allocation5 [shape = 'u8[4096]{0}', space=vmem, size = 0x1000, scoped, tag = 'input window, operand 1, single buffered']
    #allocation6 [shape = 's32[1]{0}', space=sflag, size = 0x4, scoped, tag = 'scoped memory for tpu_custom_call.1']
    #allocation7 [shape = 'u8[4096]{0}', space=vmem, size = 0x1000, scoped, tag = 'output window, operand 0, single buffered']
    %7 = vsyncpa [#allocation3], 0
    %8 = vsyncpa [#allocation6], 0
    %9 = vsyncpa [#allocation4], 0
    // Predicated region
    $region2: #{tpu_custom_call.1} parent=1 // pred_check
      _
    $region3: #{tpu_custom_call.1} parent=1 // pred_check_branch
      %11 = sbr.rel (0) target = $region5
    $region4: #{tpu_custom_call.1} parent=1 // pred_region
      %13 = vsyncadd [#allocation3], 0
      %s15 = sshll.u32 %s0, 4
      %s16 = int_to_ptr.hbm [resolvable:$true] %s15
      %s17 = sshll.u32 [#allocation2], 4
      %s18 = int_to_ptr.vmem [resolvable:$true] %s17
      %20 = dma.hbm_to_vmem [thread:$0]  %s16, 128, %s18, [#allocation3]
    $region5: #{tpu_custom_call.1} parent=1 // pred_fallthru
      _
    // Predicated region
    $region6: #{tpu_custom_call.1} parent=1 // pred_check
      _
    $region7: #{tpu_custom_call.1} parent=1 // pred_check_branch
      %22 = sbr.rel (0) target = $region9
    $region8: #{tpu_custom_call.1} parent=1 // pred_region
      %24 = vsyncadd [#allocation6], 0
      %s26 = sshll.u32 %s1, 4
      %s27 = int_to_ptr.hbm [resolvable:$true] %s26
      %s28 = sshll.u32 [#allocation5], 4
      %s29 = int_to_ptr.vmem [resolvable:$true] %s28
      %31 = dma.hbm_to_vmem [thread:$0]  %s27, 128, %s29, [#allocation6]
    $region9: #{tpu_custom_call.1} parent=1 // pred_fallthru
      _
    // Predicated region
    $region10: #{tpu_custom_call.1} parent=1 // pred_check
      _
    $region11: #{tpu_custom_call.1} parent=1 // pred_check_branch
      %33 = sbr.rel (0) target = $region13
    $region12: #{tpu_custom_call.1} parent=1 // pred_region
      %35 = dma.done [#allocation3], 128
    $region13: #{tpu_custom_call.1} parent=1 // pred_fallthru
      _
    // Predicated region
    $region14: #{tpu_custom_call.1} parent=1 // pred_check
      _
    $region15: #{tpu_custom_call.1} parent=1 // pred_check_branch
      %37 = sbr.rel (0) target = $region17
    $region16: #{tpu_custom_call.1} parent=1 // pred_region
      %39 = dma.done [#allocation6], 128
    $region17: #{tpu_custom_call.1} parent=1 // pred_fallthru
      _
    %v40 = vld [vmem:[#allocation2] sm:$0xff]
    %v41 = vld [vmem:[#allocation5] sm:$0xff]
    %v42 = vlaneseq
    %v43 = vand.u32 %v42, 127
    %vm44 = vcmp.lt.s32.totalorder %v43, 32
    %v45 = vlaneseq
    %v46 = vshrl.u32 %v45, 7
    %s47 = smul.u32 0, 8
    %v48 = vstv %s47
    %v49 = vadd.s32 %v46, %v48
    %vm50 = vcmp.lt.s32.totalorder %v49, 8
    %51 = vadd.xlane.f32.xlu0 %v41
    %v52 = vpop.xlane.xlu0 %51
    %v53 = vsel %vm50, %v52, 1.0
    %v54 = vrcp.pop %v53
    %v55 = vmul.f32 %v53, %v54
    %v56 = vsub.f32 1.0, %v55
    %v57 = vmul.f32 %v54, %v56
    %v58 = vadd.f32 %v54, %v57
    %vm59 = vweird.f32 %v53
    %vm60 = vweird.f32 %v54
    %vm61 = vmor %vm59, %vm60
    %v62 = vsel %vm61, %v54, %v58
    %v63 = vand.u32 2147483647, %v53
    %vm64 = vcmp.eq.f32.partialorder %v63, 8.507059e+37
    %v65 = vand.u32 %v53, 2147483648
    %v66 = vor.u32 1.1754944e-38, %v65
    %v67 = vsel %vm64, %v66, %v62
    %v68 = vmul.f32 %v41, %v67
    %v69 = vadd.f32 %v68, 1e-10
    %v70 = vsel %vm44, %v69, 0.0
    %v71 = vsel %vm44, %v40, -1e+30
    %72 = vmax.xlane.f32.xlu0 %v71
    %v73 = vpop.xlane.xlu0 %72
    %v74 = vsub.f32 %v71, %v73
    %v75 = vmul.f32 %v74, 1.442695
    %v76 = vpow.pop %v75
    %77 = vadd.xlane.f32.xlu0 %v76
    %v78 = vpop.xlane.xlu0 %77
    %v79 = vlog2.pop %v78
    %v80 = vmul.f32 %v79, 0.6931472
    %v81 = vmul.f32 %v70, %v74
    %82 = vadd.xlane.f32.xlu0 %v81
    %v83 = vpop.xlane.xlu0 %82
    %84 = vadd.xlane.f32.xlu0 %v70
    %v85 = vpop.xlane.xlu0 %84
    %v86 = vmul.f32 %v80, %v85
    %v87 = vsub.f32 %v83, %v86
    %v88 = vsel %vm50, %v87, 0.0
    %vm89 = vcmask 7168
    %v90 = vsel %vm89, %v88, 0.0
    %91 = vadd.xlane.f32.xlu0 %v90
    %v92 = vpop.xlane.xlu0 %91
    %v93 = vrot.slane %v92, 4
    %v94 = vadd.f32 %v92, %v93
    %v95 = vrot.slane %v94, 2
    %v96 = vadd.f32 %v94, %v95
    %v97 = vrot.slane %v96, 1
    %v98 = vadd.f32 %v96, %v97
    %s99 = vtos %v98
    %v100 = vstv %s99
    %101 = vst [vmem:[#allocation7] sm:$0xff] %v100
    // Predicated region
    $region18: #{tpu_custom_call.1} parent=1 // pred_check
      _
    $region19: #{tpu_custom_call.1} parent=1 // pred_check_branch
      %103 = sbr.rel (0) target = $region21
    $region20: #{tpu_custom_call.1} parent=1 // pred_region
      %105 = vsyncadd [#allocation4], 0
      %s107 = sshll.u32 [#allocation7], 4
      %s108 = int_to_ptr.vmem [resolvable:$true] %s107
      %s109 = sshll.u32 %s2, 4
      %s110 = int_to_ptr.hbm [resolvable:$true] %s109
      %112 = dma.vmem_to_hbm [thread:$0]  %s108, 128, %s110, [#allocation4]
    $region21: #{tpu_custom_call.1} parent=1 // pred_fallthru
      _
    // Predicated region
    $region22: #{tpu_custom_call.1} parent=1 // pred_check
      _
    $region23: #{tpu_custom_call.1} parent=1 // pred_check_branch
      %114 = sbr.rel (0) target = $region25
    $region24: #{tpu_custom_call.1} parent=1 // pred_region
      %116 = dma.done [#allocation4], 128
    $region25: #{tpu_custom_call.1} parent=1 // pred_fallthru
      _
    %117 = vsyncpa [#allocation3], 1
    %118 = vsyncpa [#allocation6], 1
    %119 = vsyncpa [#allocation4], 1

</llo_original>
